<compile_context>
chip_gen: v7x
topology: tpu7x:2x2x1
jax: 0.10.0
libtpu: 0.0.40
codegen_flags: <defaults>
</compile_context>

<pallas_src>
import functools

import jax
import jax.numpy as jnp
import numpy as np
from jax.experimental import pallas as pl
from jax.experimental.pallas import tpu as pltpu

HIDDEN = 256
LN_EPS = 1e-5
LANE = 128


def _round_up(n, m):
    return ((n + m - 1) // m) * m


def _cdiv(a, b):
    return (a + b - 1) // b


def _layernorm(h, gamma, beta):
    # E[x^2] - E[x]^2 form: sum(h) and sum(h*h) are independent lane reductions,
    # so they overlap on the XLU instead of the serialized mean->sub->sq->mean
    # chain. f32 throughout (v5e VPU/EUP have no bf16). var clamped at 0 guards
    # mild cancellation and the all-constant rows produced by batch padding.
    n_inv = 1.0 / h.shape[-1]
    s1 = jnp.sum(h, axis=-1, keepdims=True)
    s2 = jnp.sum(h * h, axis=-1, keepdims=True)
    mu = s1 * n_inv
    var = jnp.maximum(s2 * n_inv - mu * mu, 0.0)
    inv = jax.lax.rsqrt(var + LN_EPS)
    return (h - mu) * inv * gamma + beta


def _dueling_dqn_kernel(
    output_dim,
    x_ref,       # (TILE_B, input_dim)   f32 (or bf16)
    w1_ref,      # (input_dim, 256)      bf16
    w24_ref,     # (256, 512)            bf16  [W2 | W4]
    w3p_ref,     # (256, OUT_PAD)        bf16  cols: [w3 | sum(w3) | 0...]
    vecs_ref,    # (8, 256)              f32   packed b1,g1,be1,g2,be2,g4,be4,w5
    b24_ref,     # (1, 512)              f32   [b2 | b4]
    b3p_ref,     # (1, OUT_PAD)          f32   cols: [b3 | sum(b3) | 0...]
    b5_ref,      # (1, 1)                f32   SMEM scalar
    out_ref,     # (TILE_B, OUT_PAD)     bf16
):
    x = x_ref[...]
    x_bf = x if x.dtype == jnp.bfloat16 else x.astype(jnp.bfloat16)

    vecs = vecs_ref[...]
    b1, g1, be1 = vecs[0:1, :], vecs[1:2, :], vecs[2:3, :]
    g2, be2 = vecs[3:4, :], vecs[4:5, :]
    g4, be4 = vecs[5:6, :], vecs[6:7, :]
    w5_row = vecs[7:8, :]

    # ---- feature_net: Linear -> LayerNorm -> ReLU -> (Dropout = identity) ----
    h = jnp.dot(x_bf, w1_ref[...], preferred_element_type=jnp.float32) + b1
    features = jnp.maximum(_layernorm(h, g1, be1), 0.0)

    # ---- fused hidden matmul for advantage + value branches ----
    hv = jnp.dot(features.astype(jnp.bfloat16), w24_ref[...],
                 preferred_element_type=jnp.float32) + b24_ref[...]
    a_h = jnp.maximum(_layernorm(hv[:, :HIDDEN], g2, be2), 0.0)
    v_h = jnp.maximum(_layernorm(hv[:, HIDDEN:], g4, be4), 0.0)

    # ---- advantage head (lane-dense, sum-of-columns folded into lane od) ----
    advantage = jnp.dot(a_h.astype(jnp.bfloat16), w3p_ref[...],
                        preferred_element_type=jnp.float32) + b3p_ref[...]

    # ---- value head: lane reduction instead of a degenerate N=1 MXU matmul ----
    value = jnp.sum(v_h * w5_row, axis=-1, keepdims=True) + b5_ref[0, 0]

    # ---- dueling combine ----
    # Column `output_dim` of the padded W3/b3 holds the row-sum of the real
    # advantage columns (computed by the MXU for free in a padded lane), so the
    # mean is a single-lane read instead of a full cross-lane reduction.
    adv_mean = advantage[:, output_dim:output_dim + 1] * (1.0 / output_dim)
    out_ref[...] = (value + (advantage - adv_mean)).astype(out_ref.dtype)


def _choose_tiling(batch, max_tile_b):
    """Pad batch to 8-row granularity per step; keep >=2 grid steps when possible."""
    b8 = _round_up(max(batch, 1), 8)
    max_tile_b = max(8, _round_up(min(int(max_tile_b), b8), 8))
    num_steps = _cdiv(b8, max_tile_b)
    if b8 >= 16:
        # >=2 steps so dimension_semantics=("parallel",) can shard across the
        # two v7x TensorCores; on 1-TC chips the extra ~0.35us step is noise.
        num_steps = max(num_steps, 2)
    tile_b = _round_up(_cdiv(b8, num_steps), 8)
    batch_p = tile_b * num_steps
    return tile_b, batch_p, num_steps


def dueling_dqn_forward(x, params, max_tile_b=1024):
    batch, input_dim = x.shape
    output_dim = params["w3"].shape[1]

    # tile_b <= 1024 is v7x-safe (64 MiB physical / 2-TC); raise max_tile_b up
    # to ~2048 on v5e/v6e if the batch is huge and VMEM headroom allows.
    tile_b, batch_p, _ = _choose_tiling(batch, max_tile_b)
    if batch_p != batch:
        x = jnp.pad(x, ((0, batch_p - batch), (0, 0)))   # zero rows -> finite LN

    # +1 guarantees a spare padded lane for the folded advantage row-sum even
    # when output_dim is itself a multiple of 128.
    out_pad = _round_up(output_dim + 1, LANE)

    # ---- pack parameters: bf16 weights, f32 bias/LayerNorm vectors ----
    w1 = params["w1"].astype(jnp.bfloat16)
    w24 = jnp.concatenate([params["w2"], params["w4"]], axis=1).astype(jnp.bfloat16)
    b24 = jnp.concatenate([params["b2"], params["b4"]], axis=1).astype(jnp.float32)

    w3_f = params["w3"].astype(jnp.float32)
    b3_f = params["b3"].astype(jnp.float32).reshape(1, -1)
    w3p_f = jnp.zeros((HIDDEN, out_pad), jnp.float32)
    w3p_f = w3p_f.at[:, :output_dim].set(w3_f)
    w3p_f = w3p_f.at[:, output_dim].set(jnp.sum(w3_f, axis=1))   # folded row-sum col
    w3p = w3p_f.astype(jnp.bfloat16)
    b3p = jnp.zeros((1, out_pad), jnp.float32)
    b3p = b3p.at[:, :output_dim].set(b3_f)
    b3p = b3p.at[0, output_dim].set(jnp.sum(b3_f))

    vecs = jnp.concatenate(
        [params["b1"], params["g1"], params["be1"],
         params["g2"], params["be2"],
         params["g4"], params["be4"],
         params["w5"].reshape(1, HIDDEN)], axis=0).astype(jnp.float32)   # (8, 256)
    b5 = params["b5"].reshape(1, 1).astype(jnp.float32)

    grid = (batch_p // tile_b,)

    # Explicit scoped-VMEM limit sized from the tile (weights double-buffered +
    # ~14 KiB live intermediates per row + x/out double buffers), clamped well
    # under v7x's 64 MiB physical per-TC VMEM.
    w_bytes = (input_dim * HIDDEN * 2 + HIDDEN * 2 * HIDDEN * 2
               + HIDDEN * out_pad * 2 + 8 * HIDDEN * 4 + 2 * HIDDEN * 4 + out_pad * 4)
    x_bytes = input_dim * x.dtype.itemsize
    per_row = 2 * x_bytes + 2 * out_pad * 2 + 14 * 1024
    vmem_limit = int(min(max(32 << 20, 2 * (2 * w_bytes + tile_b * per_row)), 56 << 20))

    def _const(shape):
        # Constant index_map: DMA'd once, stays VMEM-resident across grid steps.
        return pl.BlockSpec(shape, lambda i: (0, 0))

    out = pl.pallas_call(
        functools.partial(_dueling_dqn_kernel, output_dim),
        grid=grid,
        out_shape=jax.ShapeDtypeStruct((batch_p, out_pad), jnp.bfloat16),
        in_specs=[
            pl.BlockSpec((tile_b, input_dim), lambda i: (i, 0)),      # x
            _const((input_dim, HIDDEN)),                              # w1
            _const((HIDDEN, 2 * HIDDEN)),                             # w24
            _const((HIDDEN, out_pad)),                                # w3 padded
            _const((8, HIDDEN)),                                      # packed vecs
            _const((1, 2 * HIDDEN)),                                  # b24
            _const((1, out_pad)),                                     # b3 padded
            pl.BlockSpec((1, 1), lambda i: (0, 0),
                         memory_space=pltpu.MemorySpace.SMEM),        # b5 scalar
        ],
        out_specs=pl.BlockSpec((tile_b, out_pad), lambda i: (i, 0)),
        compiler_params=pltpu.CompilerParams(
            dimension_semantics=("parallel",),
            vmem_limit_bytes=vmem_limit),
    )(x, w1, w24, w3p, vecs, b24, b3p, b5)

    # Small slice + cast; padded lanes/rows never leave the wrapper.
    return out[:batch, :output_dim].astype(jnp.float32)


def _orthogonal(key, shape, gain):
    """Deterministic orthogonal init (matches torch.nn.init.orthogonal_ semantics)."""
    rows, cols = shape
    n = max(rows, cols)
    a = jax.random.normal(key, (n, min(rows, cols)), dtype=jnp.float32)
    q, r = jnp.linalg.qr(a)
    q = q * jnp.sign(jnp.diag(r))  # deterministic sign convention
    q = q[:rows, :cols] if rows >= cols else q[:cols, :rows].T
    return gain * q


def init_params(key, input_dim, output_dim):
    gain = float(np.sqrt(2.0))
    keys = jax.random.split(key, 5)
    # Weights stored as (in, out) == PyTorch weight.T
    return {
        "w1": _orthogonal(keys[0], (input_dim, HIDDEN), gain),
        "b1": jnp.zeros((1, HIDDEN), jnp.float32),
        "g1": jnp.ones((1, HIDDEN), jnp.float32),
        "be1": jnp.zeros((1, HIDDEN), jnp.float32),
        "w2": _orthogonal(keys[1], (HIDDEN, HIDDEN), gain),
        "b2": jnp.zeros((1, HIDDEN), jnp.float32),
        "g2": jnp.ones((1, HIDDEN), jnp.float32),
        "be2": jnp.zeros((1, HIDDEN), jnp.float32),
        "w3": _orthogonal(keys[2], (HIDDEN, output_dim), gain),
        "b3": jnp.zeros((1, output_dim), jnp.float32),
        "w4": _orthogonal(keys[3], (HIDDEN, HIDDEN), gain),
        "b4": jnp.zeros((1, HIDDEN), jnp.float32),
        "g4": jnp.ones((1, HIDDEN), jnp.float32),
        "be4": jnp.zeros((1, HIDDEN), jnp.float32),
        "w5": _orthogonal(keys[4], (HIDDEN, 1), gain),
        "b5": jnp.zeros((1, 1), jnp.float32),
    }


def reference_forward(x, p):
    def ln(h, g, b):
        mu = jnp.mean(h, axis=-1, keepdims=True)
        var = jnp.mean((h - mu) ** 2, axis=-1, keepdims=True)
        return (h - mu) / jnp.sqrt(var + LN_EPS) * g + b

    f = jax.nn.relu(ln(x @ p["w1"] + p["b1"], p["g1"], p["be1"]))
    a = jax.nn.relu(ln(f @ p["w2"] + p["b2"], p["g2"], p["be2"]))
    adv = a @ p["w3"] + p["b3"]
    v = jax.nn.relu(ln(f @ p["w4"] + p["b4"], p["g4"], p["be4"]))
    val = v @ p["w5"] + p["b5"]
    return val + (adv - jnp.mean(adv, axis=1, keepdims=True))


if __name__ == "__main__":
    key = jax.random.PRNGKey(0)
    k_param, k_x = jax.random.split(key)

    batch, input_dim, output_dim = 8, 32, 16
    params = init_params(k_param, input_dim, output_dim)
    x = jax.random.normal(k_x, (batch, input_dim), dtype=jnp.float32)

    out = dueling_dqn_forward(x, params)
    out = jax.block_until_ready(out)

    ref = reference_forward(x, params)
    # bf16 MXU operands + bf16 output store (f32 accumulation / LayerNorm)
    # -> relaxed tolerance vs f32 reference.
    np.testing.assert_allclose(np.asarray(out), np.asarray(ref), rtol=5e-2, atol=5e-2)

    print("KERNEL_OK")
</pallas_src>

<mosaic_0001>
module attributes {stable_mosaic.version = 11 : i64} {
  func.func @_dueling_dqn_kernel(%arg0: i32, %arg1: memref<8x32xf32, #tpu.memory_space<vmem>>, %arg2: memref<32x256xbf16, #tpu.memory_space<vmem>>, %arg3: memref<256x512xbf16, #tpu.memory_space<vmem>>, %arg4: memref<256x128xbf16, #tpu.memory_space<vmem>>, %arg5: memref<8x256xf32, #tpu.memory_space<vmem>>, %arg6: memref<1x512xf32, #tpu.memory_space<vmem>>, %arg7: memref<1x128xf32, #tpu.memory_space<vmem>>, %arg8: memref<1x1xf32, #tpu.memory_space<smem>>, %arg9: memref<8x128xbf16, #tpu.memory_space<vmem>>) attributes {dimension_semantics = [#tpu.dimension_semantics<parallel>], iteration_bounds = array<i64: 1>, scalar_prefetch = 0 : i64, scratch_operands = 0 : i64, tpu.core_type = #tpu.core_type<tc>, window_params = [{transform_indices = @transform_0, window_bounds = array<i64: 8, 32>}, {pipeline_mode = #tpu.pipeline_mode<synchronous>, transform_indices = @transform_1, window_bounds = array<i64: 32, 256>}, {pipeline_mode = #tpu.pipeline_mode<synchronous>, transform_indices = @transform_2, window_bounds = array<i64: 256, 512>}, {pipeline_mode = #tpu.pipeline_mode<synchronous>, transform_indices = @transform_3, window_bounds = array<i64: 256, 128>}, {pipeline_mode = #tpu.pipeline_mode<synchronous>, transform_indices = @transform_4, window_bounds = array<i64: 8, 256>}, {pipeline_mode = #tpu.pipeline_mode<synchronous>, transform_indices = @transform_5, window_bounds = array<i64: 1, 512>}, {pipeline_mode = #tpu.pipeline_mode<synchronous>, transform_indices = @transform_6, window_bounds = array<i64: 1, 128>}, {transform_indices = @transform_7, window_bounds = array<i64: 1, 1>}, {transform_indices = @transform_8, window_bounds = array<i64: 8, 128>}]} {
    %c0 = arith.constant 0 : index
    %c0_0 = arith.constant 0 : index
    %0 = vector.load %arg1[%c0, %c0_0] : memref<8x32xf32, #tpu.memory_space<vmem>>, vector<8x32xf32>
    %1 = arith.truncf %0 : vector<8x32xf32> to vector<8x32xbf16>
    %c0_1 = arith.constant 0 : index
    %c0_2 = arith.constant 0 : index
    %2 = vector.load %arg5[%c0_1, %c0_2] : memref<8x256xf32, #tpu.memory_space<vmem>>, vector<8x256xf32>
    %3 = vector.extract_strided_slice %2 {offsets = [0, 0], sizes = [1, 256], strides = [1, 1]} : vector<8x256xf32> to vector<1x256xf32>
    %4 = vector.extract_strided_slice %2 {offsets = [1, 0], sizes = [1, 256], strides = [1, 1]} : vector<8x256xf32> to vector<1x256xf32>
    %5 = vector.extract_strided_slice %2 {offsets = [2, 0], sizes = [1, 256], strides = [1, 1]} : vector<8x256xf32> to vector<1x256xf32>
    %6 = vector.extract_strided_slice %2 {offsets = [3, 0], sizes = [1, 256], strides = [1, 1]} : vector<8x256xf32> to vector<1x256xf32>
    %7 = vector.extract_strided_slice %2 {offsets = [4, 0], sizes = [1, 256], strides = [1, 1]} : vector<8x256xf32> to vector<1x256xf32>
    %8 = vector.extract_strided_slice %2 {offsets = [5, 0], sizes = [1, 256], strides = [1, 1]} : vector<8x256xf32> to vector<1x256xf32>
    %9 = vector.extract_strided_slice %2 {offsets = [6, 0], sizes = [1, 256], strides = [1, 1]} : vector<8x256xf32> to vector<1x256xf32>
    %10 = vector.extract_strided_slice %2 {offsets = [7, 0], sizes = [1, 256], strides = [1, 1]} : vector<8x256xf32> to vector<1x256xf32>
    %c0_3 = arith.constant 0 : index
    %c0_4 = arith.constant 0 : index
    %11 = vector.load %arg2[%c0_3, %c0_4] : memref<32x256xbf16, #tpu.memory_space<vmem>>, vector<32x256xbf16>
    %cst = arith.constant dense<0.000000e+00> : vector<8x256xf32>
    %12 = tpu.matmul %1, %11, %cst {dimension_numbers = #tpu.dot_dimension_numbers<[1], [0], [0], [1], [0, 0, 1, 1], [], []>} : vector<8x32xbf16>, vector<32x256xbf16>, vector<8x256xf32> -> vector<8x256xf32>
    %13 = vector.broadcast %3 : vector<1x256xf32> to vector<8x256xf32>
    %14 = arith.addf %12, %13 : vector<8x256xf32>
    %cst_5 = arith.constant dense<0.000000e+00> : vector<8xf32>
    %15 = vector.multi_reduction <add>, %14, %cst_5 [1] : vector<8x256xf32> to vector<8xf32>
    %16 = vector.shape_cast %15 : vector<8xf32> to vector<8x1xf32>
    %17 = arith.mulf %14, %14 : vector<8x256xf32>
    %cst_6 = arith.constant dense<0.000000e+00> : vector<8xf32>
    %18 = vector.multi_reduction <add>, %17, %cst_6 [1] : vector<8x256xf32> to vector<8xf32>
    %19 = vector.shape_cast %18 : vector<8xf32> to vector<8x1xf32>
    %cst_7 = arith.constant 3.906250e-03 : f32
    %20 = vector.broadcast %cst_7 : f32 to vector<8x1xf32>
    %21 = arith.mulf %16, %20 : vector<8x1xf32>
    %cst_8 = arith.constant 3.906250e-03 : f32
    %22 = vector.broadcast %cst_8 : f32 to vector<8x1xf32>
    %23 = arith.mulf %19, %22 : vector<8x1xf32>
    %24 = arith.mulf %21, %21 : vector<8x1xf32>
    %25 = arith.subf %23, %24 : vector<8x1xf32>
    %cst_9 = arith.constant 0.000000e+00 : f32
    %26 = vector.broadcast %cst_9 : f32 to vector<8x1xf32>
    %27 = arith.maximumf %25, %26 : vector<8x1xf32>
    %cst_10 = arith.constant 9.99999974E-6 : f32
    %28 = vector.broadcast %cst_10 : f32 to vector<8x1xf32>
    %29 = arith.addf %27, %28 : vector<8x1xf32>
    %30 = math.rsqrt %29 : vector<8x1xf32>
    %31 = vector.broadcast %21 : vector<8x1xf32> to vector<8x256xf32>
    %32 = arith.subf %14, %31 : vector<8x256xf32>
    %33 = vector.broadcast %30 : vector<8x1xf32> to vector<8x256xf32>
    %34 = arith.mulf %32, %33 : vector<8x256xf32>
    %35 = vector.broadcast %4 : vector<1x256xf32> to vector<8x256xf32>
    %36 = arith.mulf %34, %35 : vector<8x256xf32>
    %37 = vector.broadcast %5 : vector<1x256xf32> to vector<8x256xf32>
    %38 = arith.addf %36, %37 : vector<8x256xf32>
    %cst_11 = arith.constant 0.000000e+00 : f32
    %39 = vector.broadcast %cst_11 : f32 to vector<8x256xf32>
    %40 = arith.maximumf %38, %39 : vector<8x256xf32>
    %41 = arith.truncf %40 : vector<8x256xf32> to vector<8x256xbf16>
    %c0_12 = arith.constant 0 : index
    %c0_13 = arith.constant 0 : index
    %42 = vector.load %arg3[%c0_12, %c0_13] : memref<256x512xbf16, #tpu.memory_space<vmem>>, vector<256x512xbf16>
    %cst_14 = arith.constant dense<0.000000e+00> : vector<8x512xf32>
    %43 = tpu.matmul %41, %42, %cst_14 {dimension_numbers = #tpu.dot_dimension_numbers<[1], [0], [0], [1], [0, 0, 1, 1], [], []>} : vector<8x256xbf16>, vector<256x512xbf16>, vector<8x512xf32> -> vector<8x512xf32>
    %c0_15 = arith.constant 0 : index
    %c0_16 = arith.constant 0 : index
    %44 = vector.load %arg6[%c0_15, %c0_16] : memref<1x512xf32, #tpu.memory_space<vmem>>, vector<1x512xf32>
    %45 = vector.broadcast %44 : vector<1x512xf32> to vector<8x512xf32>
    %46 = arith.addf %43, %45 : vector<8x512xf32>
    %47 = vector.extract_strided_slice %46 {offsets = [0, 0], sizes = [8, 256], strides = [1, 1]} : vector<8x512xf32> to vector<8x256xf32>
    %cst_17 = arith.constant dense<0.000000e+00> : vector<8xf32>
    %48 = vector.multi_reduction <add>, %47, %cst_17 [1] : vector<8x256xf32> to vector<8xf32>
    %49 = vector.shape_cast %48 : vector<8xf32> to vector<8x1xf32>
    %50 = arith.mulf %47, %47 : vector<8x256xf32>
    %cst_18 = arith.constant dense<0.000000e+00> : vector<8xf32>
    %51 = vector.multi_reduction <add>, %50, %cst_18 [1] : vector<8x256xf32> to vector<8xf32>
    %52 = vector.shape_cast %51 : vector<8xf32> to vector<8x1xf32>
    %cst_19 = arith.constant 3.906250e-03 : f32
    %53 = vector.broadcast %cst_19 : f32 to vector<8x1xf32>
    %54 = arith.mulf %49, %53 : vector<8x1xf32>
    %cst_20 = arith.constant 3.906250e-03 : f32
    %55 = vector.broadcast %cst_20 : f32 to vector<8x1xf32>
    %56 = arith.mulf %52, %55 : vector<8x1xf32>
    %57 = arith.mulf %54, %54 : vector<8x1xf32>
    %58 = arith.subf %56, %57 : vector<8x1xf32>
    %cst_21 = arith.constant 0.000000e+00 : f32
    %59 = vector.broadcast %cst_21 : f32 to vector<8x1xf32>
    %60 = arith.maximumf %58, %59 : vector<8x1xf32>
    %cst_22 = arith.constant 9.99999974E-6 : f32
    %61 = vector.broadcast %cst_22 : f32 to vector<8x1xf32>
    %62 = arith.addf %60, %61 : vector<8x1xf32>
    %63 = math.rsqrt %62 : vector<8x1xf32>
    %64 = vector.broadcast %54 : vector<8x1xf32> to vector<8x256xf32>
    %65 = arith.subf %47, %64 : vector<8x256xf32>
    %66 = vector.broadcast %63 : vector<8x1xf32> to vector<8x256xf32>
    %67 = arith.mulf %65, %66 : vector<8x256xf32>
    %68 = vector.broadcast %6 : vector<1x256xf32> to vector<8x256xf32>
    %69 = arith.mulf %67, %68 : vector<8x256xf32>
    %70 = vector.broadcast %7 : vector<1x256xf32> to vector<8x256xf32>
    %71 = arith.addf %69, %70 : vector<8x256xf32>
    %cst_23 = arith.constant 0.000000e+00 : f32
    %72 = vector.broadcast %cst_23 : f32 to vector<8x256xf32>
    %73 = arith.maximumf %71, %72 : vector<8x256xf32>
    %74 = vector.extract_strided_slice %46 {offsets = [0, 256], sizes = [8, 256], strides = [1, 1]} : vector<8x512xf32> to vector<8x256xf32>
    %cst_24 = arith.constant dense<0.000000e+00> : vector<8xf32>
    %75 = vector.multi_reduction <add>, %74, %cst_24 [1] : vector<8x256xf32> to vector<8xf32>
    %76 = vector.shape_cast %75 : vector<8xf32> to vector<8x1xf32>
    %77 = arith.mulf %74, %74 : vector<8x256xf32>
    %cst_25 = arith.constant dense<0.000000e+00> : vector<8xf32>
    %78 = vector.multi_reduction <add>, %77, %cst_25 [1] : vector<8x256xf32> to vector<8xf32>
    %79 = vector.shape_cast %78 : vector<8xf32> to vector<8x1xf32>
    %cst_26 = arith.constant 3.906250e-03 : f32
    %80 = vector.broadcast %cst_26 : f32 to vector<8x1xf32>
    %81 = arith.mulf %76, %80 : vector<8x1xf32>
    %cst_27 = arith.constant 3.906250e-03 : f32
    %82 = vector.broadcast %cst_27 : f32 to vector<8x1xf32>
    %83 = arith.mulf %79, %82 : vector<8x1xf32>
    %84 = arith.mulf %81, %81 : vector<8x1xf32>
    %85 = arith.subf %83, %84 : vector<8x1xf32>
    %cst_28 = arith.constant 0.000000e+00 : f32
    %86 = vector.broadcast %cst_28 : f32 to vector<8x1xf32>
    %87 = arith.maximumf %85, %86 : vector<8x1xf32>
    %cst_29 = arith.constant 9.99999974E-6 : f32
    %88 = vector.broadcast %cst_29 : f32 to vector<8x1xf32>
    %89 = arith.addf %87, %88 : vector<8x1xf32>
    %90 = math.rsqrt %89 : vector<8x1xf32>
    %91 = vector.broadcast %81 : vector<8x1xf32> to vector<8x256xf32>
    %92 = arith.subf %74, %91 : vector<8x256xf32>
    %93 = vector.broadcast %90 : vector<8x1xf32> to vector<8x256xf32>
    %94 = arith.mulf %92, %93 : vector<8x256xf32>
    %95 = vector.broadcast %8 : vector<1x256xf32> to vector<8x256xf32>
    %96 = arith.mulf %94, %95 : vector<8x256xf32>
    %97 = vector.broadcast %9 : vector<1x256xf32> to vector<8x256xf32>
    %98 = arith.addf %96, %97 : vector<8x256xf32>
    %cst_30 = arith.constant 0.000000e+00 : f32
    %99 = vector.broadcast %cst_30 : f32 to vector<8x256xf32>
    %100 = arith.maximumf %98, %99 : vector<8x256xf32>
    %101 = arith.truncf %73 : vector<8x256xf32> to vector<8x256xbf16>
    %c0_31 = arith.constant 0 : index
    %c0_32 = arith.constant 0 : index
    %102 = vector.load %arg4[%c0_31, %c0_32] : memref<256x128xbf16, #tpu.memory_space<vmem>>, vector<256x128xbf16>
    %cst_33 = arith.constant dense<0.000000e+00> : vector<8x128xf32>
    %103 = tpu.matmul %101, %102, %cst_33 {dimension_numbers = #tpu.dot_dimension_numbers<[1], [0], [0], [1], [0, 0, 1, 1], [], []>} : vector<8x256xbf16>, vector<256x128xbf16>, vector<8x128xf32> -> vector<8x128xf32>
    %c0_34 = arith.constant 0 : index
    %c0_35 = arith.constant 0 : index
    %104 = vector.load %arg7[%c0_34, %c0_35] : memref<1x128xf32, #tpu.memory_space<vmem>>, vector<1x128xf32>
    %105 = vector.broadcast %104 : vector<1x128xf32> to vector<8x128xf32>
    %106 = arith.addf %103, %105 : vector<8x128xf32>
    %107 = vector.broadcast %10 : vector<1x256xf32> to vector<8x256xf32>
    %108 = arith.mulf %100, %107 : vector<8x256xf32>
    %cst_36 = arith.constant dense<0.000000e+00> : vector<8xf32>
    %109 = vector.multi_reduction <add>, %108, %cst_36 [1] : vector<8x256xf32> to vector<8xf32>
    %110 = vector.shape_cast %109 : vector<8xf32> to vector<8x1xf32>
    %c0_37 = arith.constant 0 : index
    %c0_38 = arith.constant 0 : index
    %111 = memref.load %arg8[%c0_37, %c0_38] : memref<1x1xf32, #tpu.memory_space<smem>>
    %112 = vector.broadcast %111 : f32 to vector<8x1xf32>
    %113 = arith.addf %110, %112 : vector<8x1xf32>
    %114 = vector.extract_strided_slice %106 {offsets = [0, 16], sizes = [8, 1], strides = [1, 1]} : vector<8x128xf32> to vector<8x1xf32>
    %cst_39 = arith.constant 6.250000e-02 : f32
    %115 = vector.broadcast %cst_39 : f32 to vector<8x1xf32>
    %116 = arith.mulf %114, %115 : vector<8x1xf32>
    %117 = vector.broadcast %116 : vector<8x1xf32> to vector<8x128xf32>
    %118 = arith.subf %106, %117 : vector<8x128xf32>
    %119 = vector.broadcast %113 : vector<8x1xf32> to vector<8x128xf32>
    %120 = arith.addf %119, %118 : vector<8x128xf32>
    %121 = arith.truncf %120 : vector<8x128xf32> to vector<8x128xbf16>
    %c0_40 = arith.constant 0 : index
    %c0_41 = arith.constant 0 : index
    %122 = vector.load %arg9[%c0_40, %c0_41] : memref<8x128xbf16, #tpu.memory_space<vmem>>, vector<8x128xbf16>
    tpu.vector_store %arg9[%c0_40, %c0_41], %121 {strides = array<i32>} : memref<8x128xbf16, #tpu.memory_space<vmem>>, vector<8x128xbf16>,
    return
  }
  func.func @transform_0(%arg0: i32) -> (i32, i32) {
    %c0_i32 = arith.constant 0 : i32
    %c0_i32_0 = arith.constant 0 : i32
    return %arg0, %c0_i32 : i32, i32
  }
  func.func @transform_1(%arg0: i32) -> (i32, i32) {
    %c0_i32 = arith.constant 0 : i32
    %c0_i32_0 = arith.constant 0 : i32
    %c0_i32_1 = arith.constant 0 : i32
    return %c0_i32, %c0_i32_0 : i32, i32
  }
  func.func @transform_2(%arg0: i32) -> (i32, i32) {
    %c0_i32 = arith.constant 0 : i32
    %c0_i32_0 = arith.constant 0 : i32
    %c0_i32_1 = arith.constant 0 : i32
    return %c0_i32, %c0_i32_0 : i32, i32
  }
  func.func @transform_3(%arg0: i32) -> (i32, i32) {
    %c0_i32 = arith.constant 0 : i32
    %c0_i32_0 = arith.constant 0 : i32
    %c0_i32_1 = arith.constant 0 : i32
    return %c0_i32, %c0_i32_0 : i32, i32
  }
  func.func @transform_4(%arg0: i32) -> (i32, i32) {
    %c0_i32 = arith.constant 0 : i32
    %c0_i32_0 = arith.constant 0 : i32
    %c0_i32_1 = arith.constant 0 : i32
    return %c0_i32, %c0_i32_0 : i32, i32
  }
  func.func @transform_5(%arg0: i32) -> (i32, i32) {
    %c0_i32 = arith.constant 0 : i32
    %c0_i32_0 = arith.constant 0 : i32
    %c0_i32_1 = arith.constant 0 : i32
    return %c0_i32, %c0_i32_0 : i32, i32
  }
  func.func @transform_6(%arg0: i32) -> (i32, i32) {
    %c0_i32 = arith.constant 0 : i32
    %c0_i32_0 = arith.constant 0 : i32
    %c0_i32_1 = arith.constant 0 : i32
    return %c0_i32, %c0_i32_0 : i32, i32
  }
  func.func @transform_7(%arg0: i32) -> (i32, i32) {
    %c0_i32 = arith.constant 0 : i32
    %c0_i32_0 = arith.constant 0 : i32
    %c0_i32_1 = arith.constant 0 : i32
    return %c0_i32, %c0_i32_0 : i32, i32
  }
  func.func @transform_8(%arg0: i32) -> (i32, i32) {
    %c0_i32 = arith.constant 0 : i32
    %c0_i32_0 = arith.constant 0 : i32
    return %arg0, %c0_i32 : i32, i32
  }
}

</mosaic_0001>

<llo_original>
// kernel: tpu_custom_call.1
$region0: #{tpu_custom_call.1}
  #allocation0 [shape = 'u32[]', space=smem, size = 0x4, offset = 0x4, fixed_abs, tag = 'smem constant byte address 0x4 - core index']
  #allocation1 [shape = 'u32[144,128]{1,0:T(1,128)}', space=vmem, size = 0x12000, scoped, tag = 'internal scratch']
  #allocation2 [shape = 'f32[1,1]{1,0:T(1,128)S(6)}', space=smem, size = 0x200, scoped, tag = 'scoped memory for tpu_custom_call.1']
  %s0 = inlined_call_operand.hbm [shape: f32[8,32], index: 0, kind: input, shape index: {}]
  %s1 = inlined_call_operand.hbm [shape: bf16[32,256], index: 1, kind: input, shape index: {}]
  %s2 = inlined_call_operand.hbm [shape: bf16[256,512], index: 2, kind: input, shape index: {}]
  %s3 = inlined_call_operand.hbm [shape: bf16[256,128], index: 3, kind: input, shape index: {}]
  %s4 = inlined_call_operand.vmem [shape: f32[8,256], index: 4, kind: input, shape index: {}]
  %s5 = inlined_call_operand.vmem [shape: f32[1,512], index: 5, kind: input, shape index: {}]
  %s6 = inlined_call_operand.vmem [shape: f32[1,128], index: 6, kind: input, shape index: {}]
  %s7 = inlined_call_operand.<no memory space> [shape: f32[1,1], index: 7, kind: input, shape index: {}]
  %s8 = inlined_call_operand.hbm [shape: bf16[8,128], index: 8, kind: output, shape index: {}]
  %s9 = sld [smem:[#allocation0]]
  $region58: #{tpu_custom_call.1} parent=0
    _
  %s11 = ssub.s32 1, %s9
  %s12 = scalar_select 0, %s11, %s9
  %13 = sst [smem:[#allocation2]] %s7
  $region1: #{tpu_custom_call.1} parent=0
    #allocation3 [shape = 'u8[4096]{0}', space=vmem, size = 0x1000, scoped, tag = 'input window, operand 0, single buffered']
    #allocation4 [shape = 's32[1]{0}', space=sflag, size = 0x4, scoped, tag = 'scoped memory for tpu_custom_call.1']
    #allocation5 [shape = 's32[1]{0}', space=sflag, size = 0x4, scoped, tag = 'scoped memory for tpu_custom_call.1']
    #allocation6 [shape = 'u8[16384]{0}', space=vmem, size = 0x4000, scoped, tag = 'input window, operand 1, single buffered']
    #allocation7 [shape = 's32[1]{0}', space=sflag, size = 0x4, scoped, tag = 'scoped memory for tpu_custom_call.1']
    #allocation8 [shape = 'u8[262144]{0}', space=vmem, size = 0x40000, scoped, tag = 'input window, operand 2, single buffered']
    #allocation9 [shape = 'u8[65536]{0}', space=vmem, size = 0x10000, scoped, tag = 'input window, operand 3, single buffered']
    #allocation10 [shape = 's32[1]{0}', space=sflag, size = 0x4, scoped, tag = 'scoped memory for tpu_custom_call.1']
    #allocation11 [shape = 'u8[2048]{0}', space=vmem, size = 0x800, scoped, tag = 'output window, operand 0, single buffered']
    %14 = vsyncpa [#allocation4], 0
    %15 = vsyncpa [#allocation7], 0
    %16 = vsyncpa [#allocation10], 0
    %17 = vsyncpa [#allocation5], 0
    // Predicated region
    $region2: #{tpu_custom_call.1} parent=1 // pred_check
      _
    $region3: #{tpu_custom_call.1} parent=1 // pred_check_branch
      %19 = sbr.rel (0) target = $region5
    $region4: #{tpu_custom_call.1} parent=1 // pred_region
      %s21 = ssub.s32 128, 128
      %22 = vsyncadd [#allocation4], %s21
      %s24 = sshll.u32 [#allocation3], 4
      %s25 = int_to_ptr.vmem [resolvable:$true] %s24
      %27 = dma.hbm_to_vmem [thread:$0]  %s0, 128, %s25, [#allocation4]
    $region5: #{tpu_custom_call.1} parent=1 // pred_fallthru
      _
    // Predicated region
    $region6: #{tpu_custom_call.1} parent=1 // pred_check
      _
    $region7: #{tpu_custom_call.1} parent=1 // pred_check_branch
      %29 = sbr.rel (0) target = $region9
    $region8: #{tpu_custom_call.1} parent=1 // pred_region
      %s31 = ssub.s32 512, 512
      %32 = vsyncadd [#allocation7], %s31
      %s33 = sshll.u32 [#allocation6], 4
      %s34 = int_to_ptr.vmem [resolvable:$true] %s33
      %39 = dma.hbm_to_vmem [thread:$0]  %s1, 512, %s34, [#allocation7], 128, 128, 8
    $region9: #{tpu_custom_call.1} parent=1 // pred_fallthru
      _
    // Predicated region
    $region10: #{tpu_custom_call.1} parent=1 // pred_check
      _
    $region11: #{tpu_custom_call.1} parent=1 // pred_check_branch
      %41 = sbr.rel (0) target = $region13
    $region12: #{tpu_custom_call.1} parent=1 // pred_region
      %s43 = ssub.s32 8192, 8192
      %44 = vsyncadd [#allocation7], %s43
      %s45 = sshll.u32 [#allocation8], 4
      %s46 = int_to_ptr.vmem [resolvable:$true] %s45
      %51 = dma.hbm_to_vmem [thread:$0]  %s2, 8192, %s46, [#allocation7], 256, 256, 16
    $region13: #{tpu_custom_call.1} parent=1 // pred_fallthru
      _
    // Predicated region
    $region14: #{tpu_custom_call.1} parent=1 // pred_check
      _
    $region15: #{tpu_custom_call.1} parent=1 // pred_check_branch
      %53 = sbr.rel (0) target = $region17
    $region16: #{tpu_custom_call.1} parent=1 // pred_region
      %s55 = ssub.s32 2048, 2048
      %56 = vsyncadd [#allocation10], %s55
      %s57 = sshll.u32 [#allocation9], 4
      %s58 = int_to_ptr.vmem [resolvable:$true] %s57
      %63 = dma.hbm_to_vmem [thread:$0]  %s3, 2048, %s58, [#allocation10], 64, 64, 4
    $region17: #{tpu_custom_call.1} parent=1 // pred_fallthru
      _
    // Predicated region
    $region18: #{tpu_custom_call.1} parent=1 // pred_check
      _
    $region19: #{tpu_custom_call.1} parent=1 // pred_check_branch
      %65 = sbr.rel (0) target = $region21
    $region20: #{tpu_custom_call.1} parent=1 // pred_region
      _
    $region21: #{tpu_custom_call.1} parent=1 // pred_fallthru
      _
    // Predicated region
    $region22: #{tpu_custom_call.1} parent=1 // pred_check
      _
    $region23: #{tpu_custom_call.1} parent=1 // pred_check_branch
      %67 = sbr.rel (0) target = $region25
    $region24: #{tpu_custom_call.1} parent=1 // pred_region
      _
    $region25: #{tpu_custom_call.1} parent=1 // pred_fallthru
      _
    // Predicated region
    $region26: #{tpu_custom_call.1} parent=1 // pred_check
      _
    $region27: #{tpu_custom_call.1} parent=1 // pred_check_branch
      %69 = sbr.rel (0) target = $region29
    $region28: #{tpu_custom_call.1} parent=1 // pred_region
      _
    $region29: #{tpu_custom_call.1} parent=1 // pred_fallthru
      _
    // Predicated region
    $region30: #{tpu_custom_call.1} parent=1 // pred_check
      _
    $region31: #{tpu_custom_call.1} parent=1 // pred_check_branch
      %71 = sbr.rel (0) target = $region33
    $region32: #{tpu_custom_call.1} parent=1 // pred_region
      _
    $region33: #{tpu_custom_call.1} parent=1 // pred_fallthru
      _
    // Predicated region
    $region34: #{tpu_custom_call.1} parent=1 // pred_check
      _
    $region35: #{tpu_custom_call.1} parent=1 // pred_check_branch
      %73 = sbr.rel (0) target = $region37
    $region36: #{tpu_custom_call.1} parent=1 // pred_region
      %74 = dma.done [#allocation4], 128
    $region37: #{tpu_custom_call.1} parent=1 // pred_fallthru
      _
    // Predicated region
    $region38: #{tpu_custom_call.1} parent=1 // pred_check
      _
    $region39: #{tpu_custom_call.1} parent=1 // pred_check_branch
      %76 = sbr.rel (0) target = $region41
    $region40: #{tpu_custom_call.1} parent=1 // pred_region
      %77 = dma.done [#allocation7], 512
    $region41: #{tpu_custom_call.1} parent=1 // pred_fallthru
      _
    // Predicated region
    $region42: #{tpu_custom_call.1} parent=1 // pred_check
      _
    $region43: #{tpu_custom_call.1} parent=1 // pred_check_branch
      %79 = sbr.rel (0) target = $region45
    $region44: #{tpu_custom_call.1} parent=1 // pred_region
      %80 = dma.done [#allocation7], 8192
    $region45: #{tpu_custom_call.1} parent=1 // pred_fallthru
      _
    // Predicated region
    $region46: #{tpu_custom_call.1} parent=1 // pred_check
      _
    $region47: #{tpu_custom_call.1} parent=1 // pred_check_branch
      %82 = sbr.rel (0) target = $region49
    $region48: #{tpu_custom_call.1} parent=1 // pred_region
      %83 = dma.done [#allocation10], 2048
    $region49: #{tpu_custom_call.1} parent=1 // pred_fallthru
      _
    %v85 = vld [vmem:[#allocation3] sm:$0xff]
    %v86 = vpack.c.bf16 %v85, %v85
    %v87 = vld [vmem:[%s4] sm:$0xff]
    %v88 = vld [vmem:[%s4 + $0x8] sm:$0xff]
    %v89 = vld [vmem:[#allocation6] sm:$0xff]
    %v90 = vld [vmem:[#allocation6 + $0x8] sm:$0xff]
    %v91 = vld [vmem:[#allocation6 + $0x10] sm:$0xff]
    %v92 = vld [vmem:[#allocation6 + $0x18] sm:$0xff]
    %v93 = vlaneseq
    %v94 = vshrl.u32 %v93, 7
    %v95 = vsub.s32 0, %v94
    %v96 = vrot.slane %v87, %v95
    %v97 = vlaneseq
    %v98 = vshrl.u32 %v97, 7
    %v99 = vsub.s32 0, %v98
    %v100 = vrot.slane %v88, %v99
    %v105 = vunpack.c.l.b16 %v89
    %v106 = vunpack.c.h.b16 %v89
    %v107 = vunpack.c.l.b16 %v90
    %v108 = vunpack.c.h.b16 %v90
    %v109 = vunpack.c.l.b16 %v91
    %v110 = vunpack.c.h.b16 %v91
    %v111 = vunpack.c.l.b16 %v92
    %v112 = vunpack.c.h.b16 %v92
    %v113 = vpack.c.b16 %v107, %v105
    %v114 = vpack.c.b16 %v108, %v106
    %v115 = vpack.c.b16 %v111, %v109
    %v116 = vpack.c.b16 %v112, %v110
    %vm121 = vcmask 261120
    %v123 = vsel %vm121, %v86, 0
    %125 = vmatprep.subr.bf16.mxu0 %v114
    %126 = vmatpush1.bf16.msra.mxu0 %v113
    %127 = vmatprep.subr.bf16.mxu0 %v116
    %128 = vmatpush1.bf16.msra.mxu0 %v115
    %129 = vmatprep.subr.bf16.mxu0 0
    %130 = vmatpush1.bf16.msra.mxu0 0
    %131 = vmatprep.subr.bf16.mxu0 0
    %132 = vmatpush1.bf16.msra.mxu0 0
    %133 = vmatprep.subr.bf16.mxu0 0
    %134 = vmatpush1.bf16.msra.mxu0 0
    %135 = vmatprep.subr.bf16.mxu0 0
    %136 = vmatpush1.bf16.msra.mxu0 0
    %137 = vmatprep.subr.bf16.mxu0 0
    %138 = vmatpush1.bf16.msra.mxu0 0
    %139 = vmatprep.subr.bf16.mxu0 0
    %140 = vmatpush1.bf16.msra.mxu0 0
    %141 = vmatprep.subr.bf16.mxu0 0
    %142 = vmatpush1.bf16.msra.mxu0 0
    %143 = vmatprep.subr.bf16.mxu0 0
    %144 = vmatpush1.bf16.msra.mxu0 0
    %145 = vmatprep.subr.bf16.mxu0 0
    %146 = vmatpush1.bf16.msra.mxu0 0
    %147 = vmatprep.subr.bf16.mxu0 0
    %148 = vmatpush1.bf16.msra.mxu0 0
    %149 = vmatprep.subr.bf16.mxu0 0
    %150 = vmatpush1.bf16.msra.mxu0 0
    %151 = vmatprep.subr.bf16.mxu0 0
    %152 = vmatpush1.bf16.msra.mxu0 0
    %153 = vmatprep.subr.bf16.mxu0 0
    %154 = vmatpush1.bf16.msra.mxu0 0
    %155 = vmatprep.subr.bf16.mxu0 0
    %156 = vmatpush1.bf16.msra.mxu0 0
    %157 = vmatprep.mubr.bf16.mxu0 0
    %158 = vmatmul.mubr.bf16.gmra.mrb[0].mxu0 %v123
    %v159 = vpop.f32.mrb[0].mxu0
    %v160 = vadd.f32 %v96, %v159
    %v161 = vpop.f32.mrb[0].mxu0
    %v162 = vadd.f32 %v100, %v161
    %v163 = vpop.f32.mrb[0].mxu0
    %v164 = vpop.f32.mrb[0].mxu0
    %165 = vdwg.mxu0
    %v166 = vadd.f32 %v160, %v162
    %167 = vadd.xlane.f32.xlu0 %v166
    %v168 = vpop.xlane.xlu0 %167
    %v169 = vmul.f32 %v160, %v160
    %v170 = vmul.f32 %v162, %v162
    %v171 = vadd.f32 %v169, %v170
    %172 = vadd.xlane.f32.xlu0 %v171
    %v173 = vpop.xlane.xlu0 %172
    %v174 = vmul.f32 %v168, 0.00390625
    %v175 = vmul.f32 %v173, 0.00390625
    %v176 = vmul.f32 %v174, %v174
    %v177 = vsub.f32 %v175, %v176
    %v178 = vmax.f32 %v177, 0.0
    %v179 = vadd.f32 %v178, 1e-05
    %v180 = vrsqrt.pop %v179
    %v181 = vsub.f32 %v160, %v174
    %v182 = vsub.f32 %v162, %v174
    %v183 = vmul.f32 %v181, %v180
    %v184 = vmul.f32 %v182, %v180
    %v185 = vlaneseq
    %v186 = vshrl.u32 %v185, 7
    %v187 = vsub.s32 1, %v186
    %v188 = vrot.slane %v87, %v187
    %v189 = vlaneseq
    %v190 = vshrl.u32 %v189, 7
    %v191 = vsub.s32 1, %v190
    %v192 = vrot.slane %v88, %v191
    %v193 = vmul.f32 %v183, %v188
    %v194 = vmul.f32 %v184, %v192
    %v195 = vlaneseq
    %v196 = vshrl.u32 %v195, 7
    %v197 = vsub.s32 2, %v196
    %v198 = vrot.slane %v87, %v197
    %v199 = vlaneseq
    %v200 = vshrl.u32 %v199, 7
    %v201 = vsub.s32 2, %v200
    %v202 = vrot.slane %v88, %v201
    %v203 = vadd.f32 %v193, %v198
    %v204 = vadd.f32 %v194, %v202
    %v205 = vmax.f32 %v203, 0.0
    %v206 = vmax.f32 %v204, 0.0
    %v207 = vpack.c.bf16 %v205, %v205
    %v208 = vpack.c.bf16 %v206, %v206
    %v209 = vld [vmem:[#allocation8] sm:$0xff]
    %v210 = vld [vmem:[#allocation8 + $0x8] sm:$0xff]
    %v211 = vld [vmem:[#allocation8 + $0x10] sm:$0xff]
    %v212 = vld [vmem:[#allocation8 + $0x18] sm:$0xff]
    %v213 = vld [vmem:[#allocation8 + $0x20] sm:$0xff]
    %v214 = vld [vmem:[#allocation8 + $0x28] sm:$0xff]
    %v215 = vld [vmem:[#allocation8 + $0x30] sm:$0xff]
    %v216 = vld [vmem:[#allocation8 + $0x38] sm:$0xff]
    %v217 = vld [vmem:[#allocation8 + $0x40] sm:$0xff]
    %v218 = vld [vmem:[#allocation8 + $0x48] sm:$0xff]
    %v219 = vld [vmem:[#allocation8 + $0x50] sm:$0xff]
    %v220 = vld [vmem:[#allocation8 + $0x58] sm:$0xff]
    %v221 = vld [vmem:[#allocation8 + $0x60] sm:$0xff]
    %v222 = vld [vmem:[#allocation8 + $0x68] sm:$0xff]
    %v223 = vld [vmem:[#allocation8 + $0x70] sm:$0xff]
    %v224 = vld [vmem:[#allocation8 + $0x78] sm:$0xff]
    %v225 = vld [vmem:[#allocation8 + $0x80] sm:$0xff]
    %v226 = vld [vmem:[#allocation8 + $0x88] sm:$0xff]
    %v227 = vld [vmem:[#allocation8 + $0x90] sm:$0xff]
    %v228 = vld [vmem:[#allocation8 + $0x98] sm:$0xff]
    %v229 = vld [vmem:[#allocation8 + $0xa0] sm:$0xff]
    %v230 = vld [vmem:[#allocation8 + $0xa8] sm:$0xff]
    %v231 = vld [vmem:[#allocation8 + $0xb0] sm:$0xff]
    %v232 = vld [vmem:[#allocation8 + $0xb8] sm:$0xff]
    %v233 = vld [vmem:[#allocation8 + $0xc0] sm:$0xff]
    %v234 = vld [vmem:[#allocation8 + $0xc8] sm:$0xff]
    %v235 = vld [vmem:[#allocation8 + $0xd0] sm:$0xff]
    %v236 = vld [vmem:[#allocation8 + $0xd8] sm:$0xff]
    %v237 = vld [vmem:[#allocation8 + $0xe0] sm:$0xff]
    %v238 = vld [vmem:[#allocation8 + $0xe8] sm:$0xff]
    %v239 = vld [vmem:[#allocation8 + $0xf0] sm:$0xff]
    %v240 = vld [vmem:[#allocation8 + $0xf8] sm:$0xff]
    %v241 = vld [vmem:[#allocation8 + $0x100] sm:$0xff]
    %v242 = vld [vmem:[#allocation8 + $0x108] sm:$0xff]
    %v243 = vld [vmem:[#allocation8 + $0x110] sm:$0xff]
    %v244 = vld [vmem:[#allocation8 + $0x118] sm:$0xff]
    %v245 = vld [vmem:[#allocation8 + $0x120] sm:$0xff]
    %v246 = vld [vmem:[#allocation8 + $0x128] sm:$0xff]
    %v247 = vld [vmem:[#allocation8 + $0x130] sm:$0xff]
    %v248 = vld [vmem:[#allocation8 + $0x138] sm:$0xff]
    %v249 = vld [vmem:[#allocation8 + $0x140] sm:$0xff]
    %v250 = vld [vmem:[#allocation8 + $0x148] sm:$0xff]
    %v251 = vld [vmem:[#allocation8 + $0x150] sm:$0xff]
    %v252 = vld [vmem:[#allocation8 + $0x158] sm:$0xff]
    %v253 = vld [vmem:[#allocation8 + $0x160] sm:$0xff]
    %v254 = vld [vmem:[#allocation8 + $0x168] sm:$0xff]
    %v255 = vld [vmem:[#allocation8 + $0x170] sm:$0xff]
    %v256 = vld [vmem:[#allocation8 + $0x178] sm:$0xff]
    %v257 = vld [vmem:[#allocation8 + $0x180] sm:$0xff]
    %v258 = vld [vmem:[#allocation8 + $0x188] sm:$0xff]
    %v259 = vld [vmem:[#allocation8 + $0x190] sm:$0xff]
    %v260 = vld [vmem:[#allocation8 + $0x198] sm:$0xff]
    %v261 = vld [vmem:[#allocation8 + $0x1a0] sm:$0xff]
    %v262 = vld [vmem:[#allocation8 + $0x1a8] sm:$0xff]
    %v263 = vld [vmem:[#allocation8 + $0x1b0] sm:$0xff]
    %v264 = vld [vmem:[#allocation8 + $0x1b8] sm:$0xff]
    %v265 = vld [vmem:[#allocation8 + $0x1c0] sm:$0xff]
    %v266 = vld [vmem:[#allocation8 + $0x1c8] sm:$0xff]
    %v267 = vld [vmem:[#allocation8 + $0x1d0] sm:$0xff]
    %v268 = vld [vmem:[#allocation8 + $0x1d8] sm:$0xff]
    %v269 = vld [vmem:[#allocation8 + $0x1e0] sm:$0xff]
    %v270 = vld [vmem:[#allocation8 + $0x1e8] sm:$0xff]
    %v271 = vld [vmem:[#allocation8 + $0x1f0] sm:$0xff]
    %v272 = vld [vmem:[#allocation8 + $0x1f8] sm:$0xff]
    %v273 = vld [vmem:[%s5] sm:$0xf]
    %v275 = vlaneseq
    %v276 = vshrl.u32 %v275, 7
    %v277 = vsub.s32 0, %v276
    %v278 = vrot.slane %v273, %v277
    %v279 = vlaneseq
    %v280 = vshrl.u32 %v279, 7
    %v281 = vsub.s32 1, %v280
    %v282 = vrot.slane %v273, %v281
    %v283 = vlaneseq
    %v284 = vshrl.u32 %v283, 7
    %v285 = vsub.s32 2, %v284
    %v286 = vrot.slane %v273, %v285
    %v287 = vlaneseq
    %v288 = vshrl.u32 %v287, 7
    %v289 = vsub.s32 3, %v288
    %v290 = vrot.slane %v273, %v289
    %v359 = vunpack.c.l.b16 %v209
    %v360 = vunpack.c.h.b16 %v209
    %v361 = vunpack.c.l.b16 %v210
    %v362 = vunpack.c.h.b16 %v210
    %v363 = vunpack.c.l.b16 %v211
    %v364 = vunpack.c.h.b16 %v211
    %v365 = vunpack.c.l.b16 %v212
    %v366 = vunpack.c.h.b16 %v212
    %v367 = vunpack.c.l.b16 %v213
    %v368 = vunpack.c.h.b16 %v213
    %v369 = vunpack.c.l.b16 %v214
    %v370 = vunpack.c.h.b16 %v214
    %v371 = vunpack.c.l.b16 %v215
    %v372 = vunpack.c.h.b16 %v215
    %v373 = vunpack.c.l.b16 %v216
    %v374 = vunpack.c.h.b16 %v216
    %v375 = vunpack.c.l.b16 %v217
    %v376 = vunpack.c.h.b16 %v217
    %v377 = vunpack.c.l.b16 %v218
    %v378 = vunpack.c.h.b16 %v218
    %v379 = vunpack.c.l.b16 %v219
    %v380 = vunpack.c.h.b16 %v219
    %v381 = vunpack.c.l.b16 %v220
    %v382 = vunpack.c.h.b16 %v220
    %v383 = vunpack.c.l.b16 %v221
    %v384 = vunpack.c.h.b16 %v221
    %v385 = vunpack.c.l.b16 %v222
    %v386 = vunpack.c.h.b16 %v222
    %v387 = vunpack.c.l.b16 %v223
    %v388 = vunpack.c.h.b16 %v223
    %v389 = vunpack.c.l.b16 %v224
    %v390 = vunpack.c.h.b16 %v224
    %v391 = vunpack.c.l.b16 %v225
    %v392 = vunpack.c.h.b16 %v225
    %v393 = vunpack.c.l.b16 %v226
    %v394 = vunpack.c.h.b16 %v226
    %v395 = vunpack.c.l.b16 %v227
    %v396 = vunpack.c.h.b16 %v227
    %v397 = vunpack.c.l.b16 %v228
    %v398 = vunpack.c.h.b16 %v228
    %v399 = vunpack.c.l.b16 %v229
    %v400 = vunpack.c.h.b16 %v229
    %v401 = vunpack.c.l.b16 %v230
    %v402 = vunpack.c.h.b16 %v230
    %v403 = vunpack.c.l.b16 %v231
    %v404 = vunpack.c.h.b16 %v231
    %v405 = vunpack.c.l.b16 %v232
    %v406 = vunpack.c.h.b16 %v232
    %v407 = vunpack.c.l.b16 %v233
    %v408 = vunpack.c.h.b16 %v233
    %v409 = vunpack.c.l.b16 %v234
    %v410 = vunpack.c.h.b16 %v234
    %v411 = vunpack.c.l.b16 %v235
    %v412 = vunpack.c.h.b16 %v235
    %v413 = vunpack.c.l.b16 %v236
    %v414 = vunpack.c.h.b16 %v236
    %v415 = vunpack.c.l.b16 %v237
    %v416 = vunpack.c.h.b16 %v237
    %v417 = vunpack.c.l.b16 %v238
    %v418 = vunpack.c.h.b16 %v238
    %v419 = vunpack.c.l.b16 %v239
    %v420 = vunpack.c.h.b16 %v239
    %v421 = vunpack.c.l.b16 %v240
    %v422 = vunpack.c.h.b16 %v240
    %v423 = vunpack.c.l.b16 %v241
    %v424 = vunpack.c.h.b16 %v241
    %v425 = vunpack.c.l.b16 %v242
    %v426 = vunpack.c.h.b16 %v242
    %v427 = vunpack.c.l.b16 %v243
    %v428 = vunpack.c.h.b16 %v243
    %v429 = vunpack.c.l.b16 %v244
    %v430 = vunpack.c.h.b16 %v244
    %v431 = vunpack.c.l.b16 %v245
    %v432 = vunpack.c.h.b16 %v245
    %v433 = vunpack.c.l.b16 %v246
    %v434 = vunpack.c.h.b16 %v246
    %v435 = vunpack.c.l.b16 %v247
    %v436 = vunpack.c.h.b16 %v247
    %v437 = vunpack.c.l.b16 %v248
    %v438 = vunpack.c.h.b16 %v248
    %v439 = vunpack.c.l.b16 %v249
    %v440 = vunpack.c.h.b16 %v249
    %v441 = vunpack.c.l.b16 %v250
    %v442 = vunpack.c.h.b16 %v250
    %v443 = vunpack.c.l.b16 %v251
    %v444 = vunpack.c.h.b16 %v251
    %v445 = vunpack.c.l.b16 %v252
    %v446 = vunpack.c.h.b16 %v252
    %v447 = vunpack.c.l.b16 %v253
    %v448 = vunpack.c.h.b16 %v253
    %v449 = vunpack.c.l.b16 %v254
    %v450 = vunpack.c.h.b16 %v254
    %v451 = vunpack.c.l.b16 %v255
    %v452 = vunpack.c.h.b16 %v255
    %v453 = vunpack.c.l.b16 %v256
    %v454 = vunpack.c.h.b16 %v256
    %v455 = vunpack.c.l.b16 %v257
    %v456 = vunpack.c.h.b16 %v257
    %v457 = vunpack.c.l.b16 %v258
    %v458 = vunpack.c.h.b16 %v258
    %v459 = vunpack.c.l.b16 %v259
    %v460 = vunpack.c.h.b16 %v259
    %v461 = vunpack.c.l.b16 %v260
    %v462 = vunpack.c.h.b16 %v260
    %v463 = vunpack.c.l.b16 %v261
    %v464 = vunpack.c.h.b16 %v261
    %v465 = vunpack.c.l.b16 %v262
    %v466 = vunpack.c.h.b16 %v262
    %v467 = vunpack.c.l.b16 %v263
    %v468 = vunpack.c.h.b16 %v263
    %v469 = vunpack.c.l.b16 %v264
    %v470 = vunpack.c.h.b16 %v264
    %v471 = vunpack.c.l.b16 %v265
    %v472 = vunpack.c.h.b16 %v265
    %v473 = vunpack.c.l.b16 %v266
    %v474 = vunpack.c.h.b16 %v266
    %v475 = vunpack.c.l.b16 %v267
    %v476 = vunpack.c.h.b16 %v267
    %v477 = vunpack.c.l.b16 %v268
    %v478 = vunpack.c.h.b16 %v268
    %v479 = vunpack.c.l.b16 %v269
    %v480 = vunpack.c.h.b16 %v269
    %v481 = vunpack.c.l.b16 %v270
    %v482 = vunpack.c.h.b16 %v270
    %v483 = vunpack.c.l.b16 %v271
    %v484 = vunpack.c.h.b16 %v271
    %v485 = vunpack.c.l.b16 %v272
    %v486 = vunpack.c.h.b16 %v272
    %v487 = vpack.c.b16 %v363, %v359
    %v488 = vpack.c.b16 %v364, %v360
    %v489 = vpack.c.b16 %v365, %v361
    %v490 = vpack.c.b16 %v366, %v362
    %v491 = vpack.c.b16 %v371, %v367
    %v492 = vpack.c.b16 %v372, %v368
    %v493 = vpack.c.b16 %v373, %v369
    %v494 = vpack.c.b16 %v374, %v370
    %v495 = vpack.c.b16 %v379, %v375
    %v496 = vpack.c.b16 %v380, %v376
    %v497 = vpack.c.b16 %v381, %v377
    %v498 = vpack.c.b16 %v382, %v378
    %v499 = vpack.c.b16 %v387, %v383
    %v500 = vpack.c.b16 %v388, %v384
    %v501 = vpack.c.b16 %v389, %v385
    %v502 = vpack.c.b16 %v390, %v386
    %v503 = vpack.c.b16 %v395, %v391
    %v504 = vpack.c.b16 %v396, %v392
    %v505 = vpack.c.b16 %v397, %v393
    %v506 = vpack.c.b16 %v398, %v394
    %v507 = vpack.c.b16 %v403, %v399
    %v508 = vpack.c.b16 %v404, %v400
    %v509 = vpack.c.b16 %v405, %v401
    %v510 = vpack.c.b16 %v406, %v402
    %v511 = vpack.c.b16 %v411, %v407
    %v512 = vpack.c.b16 %v412, %v408
    %v513 = vpack.c.b16 %v413, %v409
    %v514 = vpack.c.b16 %v414, %v410
    %v515 = vpack.c.b16 %v419, %v415
    %v516 = vpack.c.b16 %v420, %v416
    %v517 = vpack.c.b16 %v421, %v417
    %v518 = vpack.c.b16 %v422, %v418
    %v519 = vpack.c.b16 %v427, %v423
    %v520 = vpack.c.b16 %v428, %v424
    %v521 = vpack.c.b16 %v429, %v425
    %v522 = vpack.c.b16 %v430, %v426
    %v523 = vpack.c.b16 %v435, %v431
    %v524 = vpack.c.b16 %v436, %v432
    %v525 = vpack.c.b16 %v437, %v433
    %v526 = vpack.c.b16 %v438, %v434
    %v527 = vpack.c.b16 %v443, %v439
    %v528 = vpack.c.b16 %v444, %v440
    %v529 = vpack.c.b16 %v445, %v441
    %v530 = vpack.c.b16 %v446, %v442
    %v531 = vpack.c.b16 %v451, %v447
    %v532 = vpack.c.b16 %v452, %v448
    %v533 = vpack.c.b16 %v453, %v449
    %v534 = vpack.c.b16 %v454, %v450
    %v535 = vpack.c.b16 %v459, %v455
    %v536 = vpack.c.b16 %v460, %v456
    %v537 = vpack.c.b16 %v461, %v457
    %v538 = vpack.c.b16 %v462, %v458
    %v539 = vpack.c.b16 %v467, %v463
    %v540 = vpack.c.b16 %v468, %v464
    %v541 = vpack.c.b16 %v469, %v465
    %v542 = vpack.c.b16 %v470, %v466
    %v543 = vpack.c.b16 %v475, %v471
    %v544 = vpack.c.b16 %v476, %v472
    %v545 = vpack.c.b16 %v477, %v473
    %v546 = vpack.c.b16 %v478, %v474
    %v547 = vpack.c.b16 %v483, %v479
    %v548 = vpack.c.b16 %v484, %v480
    %v549 = vpack.c.b16 %v485, %v481
    %v550 = vpack.c.b16 %v486, %v482
    %615 = vmatprep.subr.bf16.mxu0 %v488
    %616 = vmatpush1.bf16.msra.mxu0 %v487
    %617 = vmatprep.subr.bf16.mxu0 %v492
    %618 = vmatpush1.bf16.msra.mxu0 %v491
    %619 = vmatprep.subr.bf16.mxu0 %v496
    %620 = vmatpush1.bf16.msra.mxu0 %v495
    %621 = vmatprep.subr.bf16.mxu0 %v500
    %622 = vmatpush1.bf16.msra.mxu0 %v499
    %623 = vmatprep.subr.bf16.mxu0 %v504
    %624 = vmatpush1.bf16.msra.mxu0 %v503
    %625 = vmatprep.subr.bf16.mxu0 %v508
    %626 = vmatpush1.bf16.msra.mxu0 %v507
    %627 = vmatprep.subr.bf16.mxu0 %v512
    %628 = vmatpush1.bf16.msra.mxu0 %v511
    %629 = vmatprep.subr.bf16.mxu0 %v516
    %630 = vmatpush1.bf16.msra.mxu0 %v515
    %631 = vmatprep.subr.bf16.mxu0 %v520
    %632 = vmatpush1.bf16.msra.mxu0 %v519
    %633 = vmatprep.subr.bf16.mxu0 %v524
    %634 = vmatpush1.bf16.msra.mxu0 %v523
    %635 = vmatprep.subr.bf16.mxu0 %v528
    %636 = vmatpush1.bf16.msra.mxu0 %v527
    %637 = vmatprep.subr.bf16.mxu0 %v532
    %638 = vmatpush1.bf16.msra.mxu0 %v531
    %639 = vmatprep.subr.bf16.mxu0 %v536
    %640 = vmatpush1.bf16.msra.mxu0 %v535
    %641 = vmatprep.subr.bf16.mxu0 %v540
    %642 = vmatpush1.bf16.msra.mxu0 %v539
    %643 = vmatprep.subr.bf16.mxu0 %v544
    %644 = vmatpush1.bf16.msra.mxu0 %v543
    %645 = vmatprep.subr.bf16.mxu0 %v548
    %646 = vmatpush1.bf16.msra.mxu0 %v547
    %647 = vmatprep.mubr.bf16.mxu0 %v208
    %648 = vmatmul.mubr.bf16.gmra.mrb[0].mxu0 %v207
    %v649 = vpop.f32.mrb[0].mxu0
    %v650 = vadd.f32 %v278, %v649
    %v651 = vpop.f32.mrb[0].mxu0
    %v652 = vadd.f32 %v282, %v651
    %v653 = vpop.f32.mrb[0].mxu0
    %v654 = vpop.f32.mrb[0].mxu0
    %655 = vdwg.mxu0
    %656 = vmatprep.subr.bf16.mxu0 %v490
    %657 = vmatpush1.bf16.msra.mxu0 %v489
    %658 = vmatprep.subr.bf16.mxu0 %v494
    %659 = vmatpush1.bf16.msra.mxu0 %v493
    %660 = vmatprep.subr.bf16.mxu0 %v498
    %661 = vmatpush1.bf16.msra.mxu0 %v497
    %662 = vmatprep.subr.bf16.mxu0 %v502
    %663 = vmatpush1.bf16.msra.mxu0 %v501
    %664 = vmatprep.subr.bf16.mxu0 %v506
    %665 = vmatpush1.bf16.msra.mxu0 %v505
    %666 = vmatprep.subr.bf16.mxu0 %v510
    %667 = vmatpush1.bf16.msra.mxu0 %v509
    %668 = vmatprep.subr.bf16.mxu0 %v514
    %669 = vmatpush1.bf16.msra.mxu0 %v513
    %670 = vmatprep.subr.bf16.mxu0 %v518
    %671 = vmatpush1.bf16.msra.mxu0 %v517
    %672 = vmatprep.subr.bf16.mxu0 %v522
    %673 = vmatpush1.bf16.msra.mxu0 %v521
    %674 = vmatprep.subr.bf16.mxu0 %v526
    %675 = vmatpush1.bf16.msra.mxu0 %v525
    %676 = vmatprep.subr.bf16.mxu0 %v530
    %677 = vmatpush1.bf16.msra.mxu0 %v529
    %678 = vmatprep.subr.bf16.mxu0 %v534
    %679 = vmatpush1.bf16.msra.mxu0 %v533
    %680 = vmatprep.subr.bf16.mxu0 %v538
    %681 = vmatpush1.bf16.msra.mxu0 %v537
    %682 = vmatprep.subr.bf16.mxu0 %v542
    %683 = vmatpush1.bf16.msra.mxu0 %v541
    %684 = vmatprep.subr.bf16.mxu0 %v546
    %685 = vmatpush1.bf16.msra.mxu0 %v545
    %686 = vmatprep.subr.bf16.mxu0 %v550
    %687 = vmatpush1.bf16.msra.mxu0 %v549
    %688 = vmatprep.mubr.bf16.mxu0 %v208
    %689 = vmatmul.mubr.bf16.gmra.mrb[0].mxu0 %v207
    %v690 = vpop.f32.mrb[0].mxu0
    %v691 = vadd.f32 %v286, %v690
    %v692 = vpop.f32.mrb[0].mxu0
    %v693 = vadd.f32 %v290, %v692
    %v694 = vpop.f32.mrb[0].mxu0
    %v695 = vpop.f32.mrb[0].mxu0
    %696 = vdwg.mxu0
    %v697 = vadd.f32 %v650, %v652
    %698 = vadd.xlane.f32.xlu0 %v697
    %v699 = vpop.xlane.xlu0 %698
    %v700 = vmul.f32 %v650, %v650
    %v701 = vmul.f32 %v652, %v652
    %v702 = vadd.f32 %v700, %v701
    %703 = vadd.xlane.f32.xlu0 %v702
    %v704 = vpop.xlane.xlu0 %703
    %v705 = vmul.f32 %v699, 0.00390625
    %v706 = vmul.f32 %v704, 0.00390625
    %v707 = vmul.f32 %v705, %v705
    %v708 = vsub.f32 %v706, %v707
    %v709 = vmax.f32 %v708, 0.0
    %v710 = vadd.f32 %v709, 1e-05
    %v711 = vrsqrt.pop %v710
    %v712 = vsub.f32 %v650, %v705
    %v713 = vsub.f32 %v652, %v705
    %v714 = vmul.f32 %v712, %v711
    %v715 = vmul.f32 %v713, %v711
    %v716 = vlaneseq
    %v717 = vshrl.u32 %v716, 7
    %v718 = vsub.s32 3, %v717
    %v719 = vrot.slane %v87, %v718
    %v720 = vlaneseq
    %v721 = vshrl.u32 %v720, 7
    %v722 = vsub.s32 3, %v721
    %v723 = vrot.slane %v88, %v722
    %v724 = vmul.f32 %v714, %v719
    %v725 = vmul.f32 %v715, %v723
    %v726 = vlaneseq
    %v727 = vshrl.u32 %v726, 7
    %v728 = vsub.s32 4, %v727
    %v729 = vrot.slane %v87, %v728
    %v730 = vlaneseq
    %v731 = vshrl.u32 %v730, 7
    %v732 = vsub.s32 4, %v731
    %v733 = vrot.slane %v88, %v732
    %v734 = vadd.f32 %v724, %v729
    %v735 = vadd.f32 %v725, %v733
    %v736 = vmax.f32 %v734, 0.0
    %v737 = vmax.f32 %v735, 0.0
    %v738 = vadd.f32 %v691, %v693
    %739 = vadd.xlane.f32.xlu0 %v738
    %v740 = vpop.xlane.xlu0 %739
    %v741 = vmul.f32 %v691, %v691
    %v742 = vmul.f32 %v693, %v693
    %v743 = vadd.f32 %v741, %v742
    %744 = vadd.xlane.f32.xlu0 %v743
    %v745 = vpop.xlane.xlu0 %744
    %v746 = vmul.f32 %v740, 0.00390625
    %v747 = vmul.f32 %v745, 0.00390625
    %v748 = vmul.f32 %v746, %v746
    %v749 = vsub.f32 %v747, %v748
    %v750 = vmax.f32 %v749, 0.0
    %v751 = vadd.f32 %v750, 1e-05
    %v752 = vrsqrt.pop %v751
    %v753 = vsub.f32 %v691, %v746
    %v754 = vsub.f32 %v693, %v746
    %v755 = vmul.f32 %v753, %v752
    %v756 = vmul.f32 %v754, %v752
    %v757 = vlaneseq
    %v758 = vshrl.u32 %v757, 7
    %v759 = vsub.s32 5, %v758
    %v760 = vrot.slane %v87, %v759
    %v761 = vlaneseq
    %v762 = vshrl.u32 %v761, 7
    %v763 = vsub.s32 5, %v762
    %v764 = vrot.slane %v88, %v763
    %v765 = vmul.f32 %v755, %v760
    %v766 = vmul.f32 %v756, %v764
    %v767 = vlaneseq
    %v768 = vshrl.u32 %v767, 7
    %v769 = vsub.s32 6, %v768
    %v770 = vrot.slane %v87, %v769
    %v771 = vlaneseq
    %v772 = vshrl.u32 %v771, 7
    %v773 = vsub.s32 6, %v772
    %v774 = vrot.slane %v88, %v773
    %v775 = vadd.f32 %v765, %v770
    %v776 = vadd.f32 %v766, %v774
    %v777 = vmax.f32 %v775, 0.0
    %v778 = vmax.f32 %v776, 0.0
    %v779 = vpack.c.bf16 %v736, %v736
    %v780 = vpack.c.bf16 %v737, %v737
    %v781 = vld [vmem:[#allocation9] sm:$0xf]
    %v782 = vld [vmem:[#allocation9 + $0x4] sm:$0xf]
    %v783 = vld [vmem:[#allocation9 + $0x8] sm:$0xf]
    %v784 = vld [vmem:[#allocation9 + $0xc] sm:$0xf]
    %v785 = vld [vmem:[#allocation9 + $0x10] sm:$0xf]
    %v786 = vld [vmem:[#allocation9 + $0x14] sm:$0xf]
    %v787 = vld [vmem:[#allocation9 + $0x18] sm:$0xf]
    %v788 = vld [vmem:[#allocation9 + $0x1c] sm:$0xf]
    %v789 = vld [vmem:[#allocation9 + $0x20] sm:$0xf]
    %v790 = vld [vmem:[#allocation9 + $0x24] sm:$0xf]
    %v791 = vld [vmem:[#allocation9 + $0x28] sm:$0xf]
    %v792 = vld [vmem:[#allocation9 + $0x2c] sm:$0xf]
    %v793 = vld [vmem:[#allocation9 + $0x30] sm:$0xf]
    %v794 = vld [vmem:[#allocation9 + $0x34] sm:$0xf]
    %v795 = vld [vmem:[#allocation9 + $0x38] sm:$0xf]
    %v796 = vld [vmem:[#allocation9 + $0x3c] sm:$0xf]
    %v797 = vld [vmem:[#allocation9 + $0x40] sm:$0xf]
    %v798 = vld [vmem:[#allocation9 + $0x44] sm:$0xf]
    %v799 = vld [vmem:[#allocation9 + $0x48] sm:$0xf]
    %v800 = vld [vmem:[#allocation9 + $0x4c] sm:$0xf]
    %v801 = vld [vmem:[#allocation9 + $0x50] sm:$0xf]
    %v802 = vld [vmem:[#allocation9 + $0x54] sm:$0xf]
    %v803 = vld [vmem:[#allocation9 + $0x58] sm:$0xf]
    %v804 = vld [vmem:[#allocation9 + $0x5c] sm:$0xf]
    %v805 = vld [vmem:[#allocation9 + $0x60] sm:$0xf]
    %v806 = vld [vmem:[#allocation9 + $0x64] sm:$0xf]
    %v807 = vld [vmem:[#allocation9 + $0x68] sm:$0xf]
    %v808 = vld [vmem:[#allocation9 + $0x6c] sm:$0xf]
    %v809 = vld [vmem:[#allocation9 + $0x70] sm:$0xf]
    %v810 = vld [vmem:[#allocation9 + $0x74] sm:$0xf]
    %v811 = vld [vmem:[#allocation9 + $0x78] sm:$0xf]
    %v812 = vld [vmem:[#allocation9 + $0x7c] sm:$0xf]
    %v813 = vld [vmem:[%s6] sm:$0x1]
    %v815 = vlaneseq
    %v816 = vshrl.u32 %v815, 7
    %v817 = vsub.s32 0, %v816
    %v818 = vrot.slane %v813, %v817
    %v852 = vunpack.c.l.b16 %v781
    %v853 = vunpack.c.l.b16 %v782
    %v854 = vunpack.c.l.b16 %v783
    %v855 = vunpack.c.l.b16 %v784
    %v856 = vunpack.c.l.b16 %v785
    %v857 = vunpack.c.l.b16 %v786
    %v858 = vunpack.c.l.b16 %v787
    %v859 = vunpack.c.l.b16 %v788
    %v860 = vunpack.c.l.b16 %v789
    %v861 = vunpack.c.l.b16 %v790
    %v862 = vunpack.c.l.b16 %v791
    %v863 = vunpack.c.l.b16 %v792
    %v864 = vunpack.c.l.b16 %v793
    %v865 = vunpack.c.l.b16 %v794
    %v866 = vunpack.c.l.b16 %v795
    %v867 = vunpack.c.l.b16 %v796
    %v868 = vunpack.c.l.b16 %v797
    %v869 = vunpack.c.l.b16 %v798
    %v870 = vunpack.c.l.b16 %v799
    %v871 = vunpack.c.l.b16 %v800
    %v872 = vunpack.c.l.b16 %v801
    %v873 = vunpack.c.l.b16 %v802
    %v874 = vunpack.c.l.b16 %v803
    %v875 = vunpack.c.l.b16 %v804
    %v876 = vunpack.c.l.b16 %v805
    %v877 = vunpack.c.l.b16 %v806
    %v878 = vunpack.c.l.b16 %v807
    %v879 = vunpack.c.l.b16 %v808
    %v880 = vunpack.c.l.b16 %v809
    %v881 = vunpack.c.l.b16 %v810
    %v882 = vunpack.c.l.b16 %v811
    %v883 = vunpack.c.l.b16 %v812
    %v884 = vpack.c.b16 %v853, %v852
    %v885 = vpack.c.b16 %v855, %v854
    %v886 = vpack.c.b16 %v857, %v856
    %v887 = vpack.c.b16 %v859, %v858
    %v888 = vpack.c.b16 %v861, %v860
    %v889 = vpack.c.b16 %v863, %v862
    %v890 = vpack.c.b16 %v865, %v864
    %v891 = vpack.c.b16 %v867, %v866
    %v892 = vpack.c.b16 %v869, %v868
    %v893 = vpack.c.b16 %v871, %v870
    %v894 = vpack.c.b16 %v873, %v872
    %v895 = vpack.c.b16 %v875, %v874
    %v896 = vpack.c.b16 %v877, %v876
    %v897 = vpack.c.b16 %v879, %v878
    %v898 = vpack.c.b16 %v881, %v880
    %v899 = vpack.c.b16 %v883, %v882
    %916 = vmatprep.subr.bf16.mxu0 0
    %917 = vmatpush1.bf16.msra.mxu0 %v884
    %918 = vmatprep.subr.bf16.mxu0 0
    %919 = vmatpush1.bf16.msra.mxu0 %v885
    %920 = vmatprep.subr.bf16.mxu0 0
    %921 = vmatpush1.bf16.msra.mxu0 %v886
    %922 = vmatprep.subr.bf16.mxu0 0
    %923 = vmatpush1.bf16.msra.mxu0 %v887
    %924 = vmatprep.subr.bf16.mxu0 0
    %925 = vmatpush1.bf16.msra.mxu0 %v888
    %926 = vmatprep.subr.bf16.mxu0 0
    %927 = vmatpush1.bf16.msra.mxu0 %v889
    %928 = vmatprep.subr.bf16.mxu0 0
    %929 = vmatpush1.bf16.msra.mxu0 %v890
    %930 = vmatprep.subr.bf16.mxu0 0
    %931 = vmatpush1.bf16.msra.mxu0 %v891
    %932 = vmatprep.subr.bf16.mxu0 0
    %933 = vmatpush1.bf16.msra.mxu0 %v892
    %934 = vmatprep.subr.bf16.mxu0 0
    %935 = vmatpush1.bf16.msra.mxu0 %v893
    %936 = vmatprep.subr.bf16.mxu0 0
    %937 = vmatpush1.bf16.msra.mxu0 %v894
    %938 = vmatprep.subr.bf16.mxu0 0
    %939 = vmatpush1.bf16.msra.mxu0 %v895
    %940 = vmatprep.subr.bf16.mxu0 0
    %941 = vmatpush1.bf16.msra.mxu0 %v896
    %942 = vmatprep.subr.bf16.mxu0 0
    %943 = vmatpush1.bf16.msra.mxu0 %v897
    %944 = vmatprep.subr.bf16.mxu0 0
    %945 = vmatpush1.bf16.msra.mxu0 %v898
    %946 = vmatprep.subr.bf16.mxu0 0
    %947 = vmatpush1.bf16.msra.mxu0 %v899
    %948 = vmatprep.mubr.bf16.mxu0 %v780
    %949 = vmatmul.mubr.bf16.gmra.mrb[0].mxu0 %v779
    %v950 = vpop.f32.mrb[0].mxu0
    %v951 = vadd.f32 %v818, %v950
    %v952 = vpop.f32.mrb[0].mxu0
    %v953 = vpop.f32.mrb[0].mxu0
    %v954 = vpop.f32.mrb[0].mxu0
    %955 = vdwg.mxu0
    %v956 = vlaneseq
    %v957 = vshrl.u32 %v956, 7
    %v958 = vsub.s32 7, %v957
    %v959 = vrot.slane %v87, %v958
    %v960 = vlaneseq
    %v961 = vshrl.u32 %v960, 7
    %v962 = vsub.s32 7, %v961
    %v963 = vrot.slane %v88, %v962
    %v964 = vmul.f32 %v777, %v959
    %v965 = vmul.f32 %v778, %v963
    %v966 = vadd.f32 %v964, %v965
    %967 = vadd.xlane.f32.xlu0 %v966
    %v968 = vpop.xlane.xlu0 %967
    %s969 = sld [smem:[#allocation2]]
    %v970 = vstv %s969
    %v971 = vadd.f32 %v968, %v970
    %v972 = vmul.f32 %v951, 0.0625
    %974 = vset.pattern.permute.xlu0 16
    %975 = vperm.xlu0 %974, %v972
    %v976 = vpop.permute.xlu0 %975
    %v978 = vsub.f32 %v951, %v976
    %v979 = vadd.f32 %v971, %v978
    %v980 = vpack.c.bf16 %v979, %v979
    %981 = vst [vmem:[#allocation11] sm:$0xf] %v980
    // Predicated region
    $region50: #{tpu_custom_call.1} parent=1 // pred_check
      _
    $region51: #{tpu_custom_call.1} parent=1 // pred_check_branch
      %983 = sbr.rel (0) target = $region53
    $region52: #{tpu_custom_call.1} parent=1 // pred_region
      %s985 = ssub.s32 64, 64
      %986 = vsyncadd [#allocation5], %s985
      %s988 = sshll.u32 [#allocation11], 4
      %s989 = int_to_ptr.vmem [resolvable:$true] %s988
      %991 = dma.vmem_to_hbm [thread:$0]  %s989, 64, %s8, [#allocation5]
    $region53: #{tpu_custom_call.1} parent=1 // pred_fallthru
      _
    // Predicated region
    $region54: #{tpu_custom_call.1} parent=1 // pred_check
      _
    $region55: #{tpu_custom_call.1} parent=1 // pred_check_branch
      %993 = sbr.rel (0) target = $region57
    $region56: #{tpu_custom_call.1} parent=1 // pred_region
      %994 = dma.done [#allocation5], 64
    $region57: #{tpu_custom_call.1} parent=1 // pred_fallthru
      _
    %995 = vsyncpa [#allocation4], 1
    %996 = vsyncpa [#allocation7], 1
    %997 = vsyncpa [#allocation10], 1
    %998 = vsyncpa [#allocation5], 1

</llo_original>
